<compile_context>
chip_gen: v5e
topology: v5e:2x2
jax: 0.10.0
libtpu: 0.0.40
codegen_flags: <defaults>
</compile_context>

<pallas_src>
import numpy as np
import jax
import jax.numpy as jnp
from jax.experimental import pallas as pl
from jax.experimental.pallas import tpu as pltpu

_SUBLANE = 8
_LANE = 128

# numpy uint32 scalars -> jaxpr literals inside the kernel (no captured consts).
_C_ROW = np.uint32(0x9E3779B1)
_C_COL = np.uint32(0x85EBCA77)
_C_SEED = np.uint32(0xC2B2AE3D)
_C_MIX = np.uint32(0x7FEB352D)
_SHIFT_A = np.uint32(16)
_SHIFT_B = np.uint32(15)
_BIAS_ROW_TAG = np.uint32(0xFFFFFFFF)  # distinct "row" stream for the bias


def _round_up(v: int, m: int) -> int:
    return ((v + m - 1) // m) * m


def _drop_threshold(p: float) -> np.uint32:
    # drop iff hash < thresh  ==>  P(drop) ~= p   (p static, in [0, 1))
    return np.uint32(min(int(round(float(p) * 4294967296.0)), 4294967295))


def _hash_u32(rows_u32, cols_u32, seed_u32):
    """Factored stateless hash -> uniform uint32 per (global row, col, seed).

    rows/cols may be narrow broadcast shapes ((tk,1) and (1,tn)): the row and
    column terms are computed on the narrow shapes and combined by ONE
    full-tile add, followed by a single xorshift-multiply finalizer round.
    Tiling-independent: depends only on global element indices.
    """
    h = (rows_u32 * _C_ROW) + (cols_u32 * _C_COL + seed_u32 * _C_SEED)
    h = h ^ (h >> _SHIFT_A)
    h = h * _C_MIX
    h = h ^ (h >> _SHIFT_B)
    return h


# ---------------------------------------------------------------------------
# Pass 1: streaming weight-mask kernel (HBM-bandwidth-bound; hash hides under
# the DMA).  TODO(synk): on real HW, pltpu.prng_random_bits could replace the
# hash once the execution environment guarantees Mosaic lowering for it.
# ---------------------------------------------------------------------------
def _make_mask_weight_kernel(p: float):
    thresh = _drop_threshold(p)  # numpy scalar -> literal, not a captured const

    def kernel(seed_ref, w_ref, o_ref):
        ki = pl.program_id(0)
        ni = pl.program_id(1)
        tk, tn = w_ref.shape
        seed = seed_ref[0].astype(jnp.uint32)
        r0 = (ki * tk).astype(jnp.uint32)
        c0 = (ni * tn).astype(jnp.uint32)
        rows = jax.lax.broadcasted_iota(jnp.int32, (tk, 1), 0).astype(jnp.uint32) + r0
        cols = jax.lax.broadcasted_iota(jnp.int32, (1, tn), 1).astype(jnp.uint32) + c0
        keep = _hash_u32(rows, cols, seed) >= thresh        # P(keep) = 1 - p
        w = w_ref[...]
        # multiply-by-mask instead of a bf16 select (kinder to v5e's VPU)
        o_ref[...] = w * keep.astype(w.dtype)

    return kernel


def _mask_weight(w_kn_padded, p, seed_arr, tk, tn):
    Kp, Np = w_kn_padded.shape
    return pl.pallas_call(
        _make_mask_weight_kernel(p),
        out_shape=jax.ShapeDtypeStruct((Kp, Np), w_kn_padded.dtype),
        grid_spec=pltpu.PrefetchScalarGridSpec(
            num_scalar_prefetch=1,
            grid=(Kp // tk, Np // tn),
            in_specs=[pl.BlockSpec((tk, tn), lambda k, n, seed: (k, n))],
            out_specs=pl.BlockSpec((tk, tn), lambda k, n, seed: (k, n)),
        ),
        compiler_params=pltpu.CompilerParams(
            dimension_semantics=("parallel", "parallel"),
            vmem_limit_bytes=32 * 1024 * 1024),
    )(seed_arr, w_kn_padded)


# ---------------------------------------------------------------------------
# Pass 2: plain tiled MXU matmul + bias (P1 + P3 accumulator pattern).
# No masking code in the hot loop.
# ---------------------------------------------------------------------------
def _matmul_bias_kernel(x_ref, w_ref, b_ref, o_ref, acc_ref):
    k = pl.program_id(2)

    @pl.when(k == 0)
    def _init():
        acc_ref[...] = jnp.zeros_like(acc_ref)

    acc_ref[...] += jnp.dot(x_ref[...], w_ref[...],
                            preferred_element_type=jnp.float32)

    @pl.when(k == pl.num_programs(2) - 1)
    def _finalize():
        o_ref[...] = (acc_ref[...] + b_ref[...]).astype(o_ref.dtype)


def _linear_pallas(x_padded, w_kn_padded, b_row_padded, out_dtype, tm, tn, tk):
    Mp, Kp = x_padded.shape
    _, Np = w_kn_padded.shape
    grid = (Mp // tm, Np // tn, Kp // tk)
    return pl.pallas_call(
        _matmul_bias_kernel,
        out_shape=jax.ShapeDtypeStruct((Mp, Np), out_dtype),
        grid_spec=pltpu.PrefetchScalarGridSpec(
            num_scalar_prefetch=0,
            grid=grid,
            in_specs=[
                pl.BlockSpec((tm, tk), lambda i, j, k: (i, k)),   # x
                pl.BlockSpec((tk, tn), lambda i, j, k: (k, j)),   # W (K, N)
                pl.BlockSpec((1, tn), lambda i, j, k: (0, j)),    # bias row
                # TODO(synk): try pipeline_mode=pl.Buffered(3) on the W spec once
                # the toolchain in this environment is confirmed to support it.
            ],
            out_specs=pl.BlockSpec((tm, tn), lambda i, j, k: (i, j)),
            scratch_shapes=[pltpu.VMEM((tm, tn), jnp.float32)],
        ),
        compiler_params=pltpu.CompilerParams(
            dimension_semantics=("parallel", "parallel", "arbitrary"),
            vmem_limit_bytes=32 * 1024 * 1024),
    )(x_padded, w_kn_padded, b_row_padded)


# ---------------------------------------------------------------------------
# Wrapper API
# ---------------------------------------------------------------------------
def prepare_dropconnect_linear(w, b, *, mxu_dtype=jnp.bfloat16):
    """One-time parameter prep: (K, N) layout, tile padding, bf16 cast.

    w: (out_features, in_features), b: (out_features,).  Call once and reuse
    the result across forward calls (the transpose/pad/cast are full HBM
    passes over W that should not be repeated every step).
    """
    N, K = w.shape
    tn = min(512, _round_up(N, _LANE))
    tk = min(1024, _round_up(K, _LANE))
    Np, Kp = _round_up(N, tn), _round_up(K, tk)
    w_kn = jnp.pad(w.T, ((0, Kp - K), (0, Np - N))).astype(mxu_dtype)
    b_row = jnp.pad(b, (0, Np - N)).reshape(1, Np).astype(jnp.float32)
    return {"w_kn": w_kn, "b_row": b_row, "N": N, "K": K, "tn": tn, "tk": tk}


def dropconnect_linear(x, prep, *, p: float = 0.1, seed: int = 0,
                       training: bool = True):
    """DropConnect-wrapped Linear forward.  x: (batch, in_features)."""
    M, K = x.shape
    assert K == prep["K"], "in_features mismatch"
    N, tn, tk = prep["N"], prep["tn"], prep["tk"]
    w_kn, b_row = prep["w_kn"], prep["b_row"]
    Kp, Np = w_kn.shape
    out_dtype = x.dtype

    p_eff = float(min(max(p, 0.0), 1.0)) if training else 0.0

    if p_eff >= 1.0:
        # Every parameter dropped -> W == 0 and b == 0 -> output is exactly 0.
        return jnp.zeros((M, N), dtype=out_dtype)

    if p_eff == 0.0:
        # Eval / p==0: plain Linear.  XLA's native matmul already sits at the
        # MXU/HBM roofline, so bypass Pallas entirely.
        x_c = jnp.pad(x, ((0, 0), (0, Kp - K))).astype(w_kn.dtype)
        y = jnp.dot(x_c, w_kn, preferred_element_type=jnp.float32) + b_row
        return y[:, :N].astype(out_dtype)

    seed_arr = jnp.asarray([seed], dtype=jnp.int32)
    seed_u32 = seed_arr[0].astype(jnp.uint32)
    thresh = _drop_threshold(p_eff)

    # Pass 1: streaming Bernoulli(keep = 1-p) mask of the weight.
    # (When Mp//tm == 1 a fused mask-in-matmul variant would save one W
    #  round-trip over HBM; the streaming pass is the general-case choice.)
    w_masked = _mask_weight(w_kn, p_eff, seed_arr, tk, tn)

    # Bias mask: N elements, negligible -> plain jnp in the wrapper, same hash.
    bcols = jax.lax.broadcasted_iota(jnp.int32, (1, Np), 1).astype(jnp.uint32)
    brows = jnp.full((1, Np), _BIAS_ROW_TAG, dtype=jnp.uint32)
    b_keep = _hash_u32(brows, bcols, seed_u32) >= thresh
    b_masked = jnp.where(b_keep, b_row, 0.0)

    # Activation tiling / padding.
    tm = min(512, _round_up(M, _SUBLANE))
    Mp = _round_up(M, tm)
    # v7x megacore: keep >= 2 blocks along a parallel axis when possible; if
    # the (M, N) grid collapsed to a single block, split N.
    if (Mp // tm) * (Np // tn) == 1 and tn > _LANE and (tn // 2) % _LANE == 0:
        tn //= 2
    x_p = jnp.pad(x, ((0, Mp - M), (0, Kp - K))).astype(w_kn.dtype)

    # Pass 2: pure tiled MXU matmul + masked-bias add.
    out = _linear_pallas(x_p, w_masked, b_masked, out_dtype, tm, tn, tk)
    return out[:M, :N]


# ---------------------------------------------------------------------------
# Pure-JAX reference (same hash-derived masks, bf16 MXU precision).
# ---------------------------------------------------------------------------
def _reference_dropconnect_linear(x, w, b, *, p, seed, training,
                                  mxu_dtype=jnp.bfloat16):
    M, K = x.shape
    N = w.shape[0]
    p_eff = float(min(max(p, 0.0), 1.0)) if training else 0.0
    if p_eff >= 1.0:
        return jnp.zeros((M, N), dtype=x.dtype)

    w_kn = w.T.astype(mxu_dtype)
    bias = b.reshape(1, N).astype(jnp.float32)
    if p_eff > 0.0:
        thresh = _drop_threshold(p_eff)
        seed_u = jnp.asarray(seed, jnp.int32).astype(jnp.uint32)
        rows = jax.lax.broadcasted_iota(jnp.int32, (K, 1), 0).astype(jnp.uint32)
        cols = jax.lax.broadcasted_iota(jnp.int32, (1, N), 1).astype(jnp.uint32)
        keep = _hash_u32(rows, cols, seed_u) >= thresh
        w_kn = w_kn * keep.astype(w_kn.dtype)
        bcols = jax.lax.broadcasted_iota(jnp.int32, (1, N), 1).astype(jnp.uint32)
        brows = jnp.full((1, N), _BIAS_ROW_TAG, dtype=jnp.uint32)
        bkeep = _hash_u32(brows, bcols, seed_u) >= thresh
        bias = jnp.where(bkeep, bias, 0.0)

    y = jnp.dot(x.astype(mxu_dtype), w_kn,
                preferred_element_type=jnp.float32) + bias
    return y.astype(x.dtype)


if __name__ == "__main__":
    # Deterministic synthetic parameters: nn.Linear(in_features=32, out=16).
    key = jax.random.PRNGKey(0)
    kx, kw, kb = jax.random.split(key, 3)

    batch, in_features, out_features = 8, 32, 16
    x = jax.random.normal(kx, (batch, in_features), dtype=jnp.float32)
    w = jax.random.normal(kw, (out_features, in_features), dtype=jnp.float32) * 0.1
    b = jax.random.normal(kb, (out_features,), dtype=jnp.float32) * 0.1

    # One-time weight prep, reused for every forward (cached (K,N) bf16 W).
    prep = prepare_dropconnect_linear(w, b)

    # Training mode: weight pre-mask pass + matmul kernel (both Pallas).
    out_train = dropconnect_linear(x, prep, p=0.1, seed=123, training=True)
    jax.block_until_ready(out_train)
    assert out_train.shape == (batch, out_features)
    ref_train = _reference_dropconnect_linear(x, w, b, p=0.1, seed=123,
                                              training=True)
    assert jnp.allclose(out_train, ref_train, atol=2e-2, rtol=2e-2), \
        "train path mismatch"

    # Eval mode: plain Linear (XLA matmul bypass), no masking.
    out_eval = dropconnect_linear(x, prep, p=0.1, seed=123, training=False)
    jax.block_until_ready(out_eval)
    ref_eval = _reference_dropconnect_linear(x, w, b, p=0.1, seed=123,
                                             training=False)
    assert jnp.allclose(out_eval, ref_eval, atol=2e-2, rtol=2e-2), \
        "eval path mismatch"

    print("KERNEL_OK")
</pallas_src>

<mosaic_0001>
module attributes {stable_mosaic.version = 11 : i64} {
  func.func @kernel(%arg0: i32, %arg1: i32, %arg2: memref<1xi32, #tpu.memory_space<smem>>, %arg3: memref<128x128xbf16, #tpu.memory_space<vmem>>, %arg4: memref<128x128xbf16, #tpu.memory_space<vmem>>) attributes {dimension_semantics = [#tpu.dimension_semantics<parallel>, #tpu.dimension_semantics<parallel>], iteration_bounds = array<i64: 1, 1>, scalar_prefetch = 1 : i64, scratch_operands = 0 : i64, tpu.core_type = #tpu.core_type<tc>, window_params = [{transform_indices = @transform_0, window_bounds = array<i64: 128, 128>}, {transform_indices = @transform_1, window_bounds = array<i64: 128, 128>}]} {
    %c0 = arith.constant 0 : index
    %0 = memref.load %arg2[%c0] : memref<1xi32, #tpu.memory_space<smem>>
    %c128_i32 = arith.constant 128 : i32
    %1 = arith.muli %arg0, %c128_i32 : i32
    %c128_i32_0 = arith.constant 128 : i32
    %2 = arith.muli %arg1, %c128_i32_0 : i32
    %3 = tpu.iota {dimensions = array<i32: 0>} : vector<128x1xi32>
    %4 = vector.broadcast %1 : i32 to vector<128x1xi32>
    %5 = arith.addi %3, %4 : vector<128x1xi32>
    %6 = tpu.iota {dimensions = array<i32: 1>} : vector<1x128xi32>
    %7 = vector.broadcast %2 : i32 to vector<1x128xi32>
    %8 = arith.addi %6, %7 : vector<1x128xi32>
    %c-1640531535_i32 = arith.constant -1640531535 : i32
    %9 = vector.broadcast %c-1640531535_i32 : i32 to vector<128x1xi32>
    %10 = arith.muli %5, %9 : vector<128x1xi32>
    %c-2048144777_i32 = arith.constant -2048144777 : i32
    %11 = vector.broadcast %c-2048144777_i32 : i32 to vector<1x128xi32>
    %12 = arith.muli %8, %11 : vector<1x128xi32>
    %c-1028477379_i32 = arith.constant -1028477379 : i32
    %13 = arith.muli %0, %c-1028477379_i32 : i32
    %14 = vector.broadcast %13 : i32 to vector<1x128xi32>
    %15 = arith.addi %12, %14 : vector<1x128xi32>
    %16 = vector.broadcast %10 : vector<128x1xi32> to vector<128x128xi32>
    %17 = vector.broadcast %15 : vector<1x128xi32> to vector<128x128xi32>
    %18 = arith.addi %16, %17 : vector<128x128xi32>
    %c16_i32 = arith.constant 16 : i32
    %19 = vector.broadcast %c16_i32 : i32 to vector<128x128xi32>
    %20 = arith.shrui %18, %19 : vector<128x128xi32>
    %21 = arith.xori %18, %20 : vector<128x128xi32>
    %c2146121005_i32 = arith.constant 2146121005 : i32
    %22 = vector.broadcast %c2146121005_i32 : i32 to vector<128x128xi32>
    %23 = arith.muli %21, %22 : vector<128x128xi32>
    %c15_i32 = arith.constant 15 : i32
    %24 = vector.broadcast %c15_i32 : i32 to vector<128x128xi32>
    %25 = arith.shrui %23, %24 : vector<128x128xi32>
    %26 = arith.xori %23, %25 : vector<128x128xi32>
    %c429496730_i32 = arith.constant 429496730 : i32
    %27 = vector.broadcast %c429496730_i32 : i32 to vector<128x128xi32>
    %28 = arith.cmpi uge, %26, %27 : vector<128x128xi32>
    %c0_1 = arith.constant 0 : index
    %c0_2 = arith.constant 0 : index
    %29 = vector.load %arg3[%c0_1, %c0_2] : memref<128x128xbf16, #tpu.memory_space<vmem>>, vector<128x128xbf16>
    %30 = arith.extui %28 : vector<128x128xi1> to vector<128x128xi32>
    %31 = arith.sitofp %30 : vector<128x128xi32> to vector<128x128xf32>
    %32 = arith.truncf %31 : vector<128x128xf32> to vector<128x128xbf16>
    %33 = arith.mulf %29, %32 : vector<128x128xbf16>
    %c0_3 = arith.constant 0 : index
    %c0_4 = arith.constant 0 : index
    %34 = vector.load %arg4[%c0_3, %c0_4] : memref<128x128xbf16, #tpu.memory_space<vmem>>, vector<128x128xbf16>
    tpu.vector_store %arg4[%c0_3, %c0_4], %33 {strides = array<i32>} : memref<128x128xbf16, #tpu.memory_space<vmem>>, vector<128x128xbf16>,
    return
  }
  func.func @transform_0(%arg0: i32, %arg1: i32, %arg2: memref<1xi32, #tpu.memory_space<smem>>) -> (i32, i32) {
    %c0_i32 = arith.constant 0 : i32
    return %arg0, %arg1 : i32, i32
  }
  func.func @transform_1(%arg0: i32, %arg1: i32, %arg2: memref<1xi32, #tpu.memory_space<smem>>) -> (i32, i32) {
    %c0_i32 = arith.constant 0 : i32
    return %arg0, %arg1 : i32, i32
  }
}

</mosaic_0001>

<llo_original>
// kernel: tpu_custom_call.1
$region0: #{tpu_custom_call.1}
  #allocation0 [shape = 'u32[]', space=smem, size = 0x4, offset = 0x4, fixed_abs, tag = 'smem constant byte address 0x4 - core index']
  #allocation1 [shape = 'u32[72,128]{1,0:T(1,128)}', space=vmem, size = 0x9000, scoped, tag = 'internal scratch']
  #allocation2 [shape = 's32[1]{0}', space=sflag, size = 0x4, scoped, tag = 'scoped memory for tpu_custom_call.1']
  #allocation3 [shape = 's32[1]{0:T(128)S(6)}', space=smem, size = 0x200, scoped, tag = 'prefetched SMEM operand 0']
  %s0 = inlined_call_operand.<no memory space> [shape: s32[1], index: 0, kind: input, shape index: {}]
  %s1 = inlined_call_operand.hbm [shape: bf16[128,128], index: 1, kind: input, shape index: {}]
  %s2 = inlined_call_operand.hbm [shape: bf16[128,128], index: 2, kind: output, shape index: {}]
  %s3 = sld [smem:[#allocation0]]
  $region18: #{tpu_custom_call.1} parent=0
    _
  %s5 = ssub.s32 1, %s3
  %s6 = scalar_select 0, %s5, %s3
  %7 = sst [smem:[#allocation3]] %s0
  $region1: #{tpu_custom_call.1} parent=0
    #allocation4 [shape = 'u8[32768]{0}', space=vmem, size = 0x8000, scoped, tag = 'input window, operand 1, single buffered']
    #allocation5 [shape = 's32[1]{0}', space=sflag, size = 0x4, scoped, tag = 'scoped memory for tpu_custom_call.1']
    #allocation6 [shape = 's32[1]{0}', space=sflag, size = 0x4, scoped, tag = 'scoped memory for tpu_custom_call.1']
    #allocation7 [shape = 'u8[32768]{0}', space=vmem, size = 0x8000, scoped, tag = 'output window, operand 0, single buffered']
    %8 = vsyncpa [#allocation5], 0
    %9 = vsyncpa [#allocation6], 0
    // Predicated region
    $region2: #{tpu_custom_call.1} parent=1 // pred_check
      _
    $region3: #{tpu_custom_call.1} parent=1 // pred_check_branch
      %11 = sbr.rel (0) target = $region5
    $region4: #{tpu_custom_call.1} parent=1 // pred_region
      %13 = vsyncadd [#allocation5], 0
      %s14 = sshll.u32 %s1, 4
      %s15 = int_to_ptr.hbm [resolvable:$true] %s14
      %s16 = sshll.u32 [#allocation4], 4
      %s17 = int_to_ptr.vmem [resolvable:$true] %s16
      %22 = dma.hbm_to_vmem [thread:$0]  %s15, 1024, %s17, [#allocation5], 64, 64, 4
    $region5: #{tpu_custom_call.1} parent=1 // pred_fallthru
      _
    // Predicated region
    $region6: #{tpu_custom_call.1} parent=1 // pred_check
      _
    $region7: #{tpu_custom_call.1} parent=1 // pred_check_branch
      %24 = sbr.rel (0) target = $region9
    $region8: #{tpu_custom_call.1} parent=1 // pred_region
      %26 = dma.done [#allocation5], 1024
    $region9: #{tpu_custom_call.1} parent=1 // pred_fallthru
      _
    %s27 = sld [smem:[#allocation3]]
    %s28 = smul.u32 0, 128
    %s29 = smul.u32 0, 128
    %v30 = vlaneseq
    %v31 = vshrl.u32 %v30, 7
    %v32 = vadd.s32 %v31, 8
    %v33 = vadd.s32 %v31, 16
    %v34 = vadd.s32 %v31, 24
    %v35 = vadd.s32 %v31, 32
    %v36 = vadd.s32 %v31, 40
    %v37 = vadd.s32 %v31, 48
    %v38 = vadd.s32 %v31, 56
    %v39 = vadd.s32 %v31, 64
    %v40 = vadd.s32 %v31, 72
    %v41 = vadd.s32 %v31, 80
    %v42 = vadd.s32 %v31, 88
    %v43 = vadd.s32 %v31, 96
    %v44 = vadd.s32 %v31, 104
    %v45 = vadd.s32 %v31, 112
    %v46 = vadd.s32 %v31, 120
    %v47 = vstv %s28
    %v48 = vadd.s32 %v31, %v47
    %v49 = vadd.s32 %v32, %v47
    %v50 = vadd.s32 %v33, %v47
    %v51 = vadd.s32 %v34, %v47
    %v52 = vadd.s32 %v35, %v47
    %v53 = vadd.s32 %v36, %v47
    %v54 = vadd.s32 %v37, %v47
    %v55 = vadd.s32 %v38, %v47
    %v56 = vadd.s32 %v39, %v47
    %v57 = vadd.s32 %v40, %v47
    %v58 = vadd.s32 %v41, %v47
    %v59 = vadd.s32 %v42, %v47
    %v60 = vadd.s32 %v43, %v47
    %v61 = vadd.s32 %v44, %v47
    %v62 = vadd.s32 %v45, %v47
    %v63 = vadd.s32 %v46, %v47
    %v64 = vlaneseq
    %v65 = vand.u32 %v64, 127
    %v66 = vstv %s29
    %v67 = vadd.s32 %v65, %v66
    %v68 = vmul.u32 %v48, 2654435761
    %v69 = vmul.u32 %v49, 2654435761
    %v70 = vmul.u32 %v50, 2654435761
    %v71 = vmul.u32 %v51, 2654435761
    %v72 = vmul.u32 %v52, 2654435761
    %v73 = vmul.u32 %v53, 2654435761
    %v74 = vmul.u32 %v54, 2654435761
    %v75 = vmul.u32 %v55, 2654435761
    %v76 = vmul.u32 %v56, 2654435761
    %v77 = vmul.u32 %v57, 2654435761
    %v78 = vmul.u32 %v58, 2654435761
    %v79 = vmul.u32 %v59, 2654435761
    %v80 = vmul.u32 %v60, 2654435761
    %v81 = vmul.u32 %v61, 2654435761
    %v82 = vmul.u32 %v62, 2654435761
    %v83 = vmul.u32 %v63, 2654435761
    %v84 = vmul.u32 %v67, 2246822519
    %s85 = smul.u32 %s27, 3266489917
    %v86 = vstv %s85
    %v87 = vadd.s32 %v84, %v86
    %v88 = vadd.s32 %v68, %v87
    %v89 = vadd.s32 %v69, %v87
    %v90 = vadd.s32 %v70, %v87
    %v91 = vadd.s32 %v71, %v87
    %v92 = vadd.s32 %v72, %v87
    %v93 = vadd.s32 %v73, %v87
    %v94 = vadd.s32 %v74, %v87
    %v95 = vadd.s32 %v75, %v87
    %v96 = vadd.s32 %v76, %v87
    %v97 = vadd.s32 %v77, %v87
    %v98 = vadd.s32 %v78, %v87
    %v99 = vadd.s32 %v79, %v87
    %v100 = vadd.s32 %v80, %v87
    %v101 = vadd.s32 %v81, %v87
    %v102 = vadd.s32 %v82, %v87
    %v103 = vadd.s32 %v83, %v87
    %v104 = vshrl.u32 %v88, 16
    %v105 = vshrl.u32 %v89, 16
    %v106 = vshrl.u32 %v90, 16
    %v107 = vshrl.u32 %v91, 16
    %v108 = vshrl.u32 %v92, 16
    %v109 = vshrl.u32 %v93, 16
    %v110 = vshrl.u32 %v94, 16
    %v111 = vshrl.u32 %v95, 16
    %v112 = vshrl.u32 %v96, 16
    %v113 = vshrl.u32 %v97, 16
    %v114 = vshrl.u32 %v98, 16
    %v115 = vshrl.u32 %v99, 16
    %v116 = vshrl.u32 %v100, 16
    %v117 = vshrl.u32 %v101, 16
    %v118 = vshrl.u32 %v102, 16
    %v119 = vshrl.u32 %v103, 16
    %v120 = vxor.u32 %v88, %v104
    %v121 = vxor.u32 %v89, %v105
    %v122 = vxor.u32 %v90, %v106
    %v123 = vxor.u32 %v91, %v107
    %v124 = vxor.u32 %v92, %v108
    %v125 = vxor.u32 %v93, %v109
    %v126 = vxor.u32 %v94, %v110
    %v127 = vxor.u32 %v95, %v111
    %v128 = vxor.u32 %v96, %v112
    %v129 = vxor.u32 %v97, %v113
    %v130 = vxor.u32 %v98, %v114
    %v131 = vxor.u32 %v99, %v115
    %v132 = vxor.u32 %v100, %v116
    %v133 = vxor.u32 %v101, %v117
    %v134 = vxor.u32 %v102, %v118
    %v135 = vxor.u32 %v103, %v119
    %v136 = vmul.u32 %v120, 2146121005
    %v137 = vmul.u32 %v121, 2146121005
    %v138 = vmul.u32 %v122, 2146121005
    %v139 = vmul.u32 %v123, 2146121005
    %v140 = vmul.u32 %v124, 2146121005
    %v141 = vmul.u32 %v125, 2146121005
    %v142 = vmul.u32 %v126, 2146121005
    %v143 = vmul.u32 %v127, 2146121005
    %v144 = vmul.u32 %v128, 2146121005
    %v145 = vmul.u32 %v129, 2146121005
    %v146 = vmul.u32 %v130, 2146121005
    %v147 = vmul.u32 %v131, 2146121005
    %v148 = vmul.u32 %v132, 2146121005
    %v149 = vmul.u32 %v133, 2146121005
    %v150 = vmul.u32 %v134, 2146121005
    %v151 = vmul.u32 %v135, 2146121005
    %v152 = vshrl.u32 %v136, 15
    %v153 = vshrl.u32 %v137, 15
    %v154 = vshrl.u32 %v138, 15
    %v155 = vshrl.u32 %v139, 15
    %v156 = vshrl.u32 %v140, 15
    %v157 = vshrl.u32 %v141, 15
    %v158 = vshrl.u32 %v142, 15
    %v159 = vshrl.u32 %v143, 15
    %v160 = vshrl.u32 %v144, 15
    %v161 = vshrl.u32 %v145, 15
    %v162 = vshrl.u32 %v146, 15
    %v163 = vshrl.u32 %v147, 15
    %v164 = vshrl.u32 %v148, 15
    %v165 = vshrl.u32 %v149, 15
    %v166 = vshrl.u32 %v150, 15
    %v167 = vshrl.u32 %v151, 15
    %v168 = vxor.u32 %v136, %v152
    %v169 = vxor.u32 %v137, %v153
    %v170 = vxor.u32 %v138, %v154
    %v171 = vxor.u32 %v139, %v155
    %v172 = vxor.u32 %v140, %v156
    %v173 = vxor.u32 %v141, %v157
    %v174 = vxor.u32 %v142, %v158
    %v175 = vxor.u32 %v143, %v159
    %v176 = vxor.u32 %v144, %v160
    %v177 = vxor.u32 %v145, %v161
    %v178 = vxor.u32 %v146, %v162
    %v179 = vxor.u32 %v147, %v163
    %v180 = vxor.u32 %v148, %v164
    %v181 = vxor.u32 %v149, %v165
    %v182 = vxor.u32 %v150, %v166
    %v183 = vxor.u32 %v151, %v167
    %v184 = vadd.s32 %v168, 2147483648
    %vm186 = vcmp.ge.s32.totalorder %v184, 2576980378
    %v187 = vadd.s32 %v169, 2147483648
    %vm189 = vcmp.ge.s32.totalorder %v187, 2576980378
    %v190 = vadd.s32 %v170, 2147483648
    %vm192 = vcmp.ge.s32.totalorder %v190, 2576980378
    %v193 = vadd.s32 %v171, 2147483648
    %vm195 = vcmp.ge.s32.totalorder %v193, 2576980378
    %v196 = vadd.s32 %v172, 2147483648
    %vm198 = vcmp.ge.s32.totalorder %v196, 2576980378
    %v199 = vadd.s32 %v173, 2147483648
    %vm201 = vcmp.ge.s32.totalorder %v199, 2576980378
    %v202 = vadd.s32 %v174, 2147483648
    %vm204 = vcmp.ge.s32.totalorder %v202, 2576980378
    %v205 = vadd.s32 %v175, 2147483648
    %vm207 = vcmp.ge.s32.totalorder %v205, 2576980378
    %v208 = vadd.s32 %v176, 2147483648
    %vm210 = vcmp.ge.s32.totalorder %v208, 2576980378
    %v211 = vadd.s32 %v177, 2147483648
    %vm213 = vcmp.ge.s32.totalorder %v211, 2576980378
    %v214 = vadd.s32 %v178, 2147483648
    %vm216 = vcmp.ge.s32.totalorder %v214, 2576980378
    %v217 = vadd.s32 %v179, 2147483648
    %vm219 = vcmp.ge.s32.totalorder %v217, 2576980378
    %v220 = vadd.s32 %v180, 2147483648
    %vm222 = vcmp.ge.s32.totalorder %v220, 2576980378
    %v223 = vadd.s32 %v181, 2147483648
    %vm225 = vcmp.ge.s32.totalorder %v223, 2576980378
    %v226 = vadd.s32 %v182, 2147483648
    %vm228 = vcmp.ge.s32.totalorder %v226, 2576980378
    %v229 = vadd.s32 %v183, 2147483648
    %vm231 = vcmp.ge.s32.totalorder %v229, 2576980378
    %v232 = vld [vmem:[#allocation4] sm:$0xf]
    %v233 = vld [vmem:[#allocation4 + $0x4] sm:$0xf]
    %v234 = vld [vmem:[#allocation4 + $0x8] sm:$0xf]
    %v235 = vld [vmem:[#allocation4 + $0xc] sm:$0xf]
    %v236 = vld [vmem:[#allocation4 + $0x10] sm:$0xf]
    %v237 = vld [vmem:[#allocation4 + $0x14] sm:$0xf]
    %v238 = vld [vmem:[#allocation4 + $0x18] sm:$0xf]
    %v239 = vld [vmem:[#allocation4 + $0x1c] sm:$0xf]
    %v240 = vld [vmem:[#allocation4 + $0x20] sm:$0xf]
    %v241 = vld [vmem:[#allocation4 + $0x24] sm:$0xf]
    %v242 = vld [vmem:[#allocation4 + $0x28] sm:$0xf]
    %v243 = vld [vmem:[#allocation4 + $0x2c] sm:$0xf]
    %v244 = vld [vmem:[#allocation4 + $0x30] sm:$0xf]
    %v245 = vld [vmem:[#allocation4 + $0x34] sm:$0xf]
    %v246 = vld [vmem:[#allocation4 + $0x38] sm:$0xf]
    %v247 = vld [vmem:[#allocation4 + $0x3c] sm:$0xf]
    %v248 = vsel %vm186, 1, 0
    %v249 = vsel %vm189, 1, 0
    %v250 = vsel %vm192, 1, 0
    %v251 = vsel %vm195, 1, 0
    %v252 = vsel %vm198, 1, 0
    %v253 = vsel %vm201, 1, 0
    %v254 = vsel %vm204, 1, 0
    %v255 = vsel %vm207, 1, 0
    %v256 = vsel %vm210, 1, 0
    %v257 = vsel %vm213, 1, 0
    %v258 = vsel %vm216, 1, 0
    %v259 = vsel %vm219, 1, 0
    %v260 = vsel %vm222, 1, 0
    %v261 = vsel %vm225, 1, 0
    %v262 = vsel %vm228, 1, 0
    %v263 = vsel %vm231, 1, 0
    %v264 = vcvt.s32.f32 %v248
    %v265 = vcvt.s32.f32 %v249
    %v266 = vcvt.s32.f32 %v250
    %v267 = vcvt.s32.f32 %v251
    %v268 = vcvt.s32.f32 %v252
    %v269 = vcvt.s32.f32 %v253
    %v270 = vcvt.s32.f32 %v254
    %v271 = vcvt.s32.f32 %v255
    %v272 = vcvt.s32.f32 %v256
    %v273 = vcvt.s32.f32 %v257
    %v274 = vcvt.s32.f32 %v258
    %v275 = vcvt.s32.f32 %v259
    %v276 = vcvt.s32.f32 %v260
    %v277 = vcvt.s32.f32 %v261
    %v278 = vcvt.s32.f32 %v262
    %v279 = vcvt.s32.f32 %v263
    %v280 = vpack.c.bf16 %v264, %v264
    %v281 = vpack.c.bf16 %v265, %v265
    %v282 = vpack.c.bf16 %v266, %v266
    %v283 = vpack.c.bf16 %v267, %v267
    %v284 = vpack.c.bf16 %v268, %v268
    %v285 = vpack.c.bf16 %v269, %v269
    %v286 = vpack.c.bf16 %v270, %v270
    %v287 = vpack.c.bf16 %v271, %v271
    %v288 = vpack.c.bf16 %v272, %v272
    %v289 = vpack.c.bf16 %v273, %v273
    %v290 = vpack.c.bf16 %v274, %v274
    %v291 = vpack.c.bf16 %v275, %v275
    %v292 = vpack.c.bf16 %v276, %v276
    %v293 = vpack.c.bf16 %v277, %v277
    %v294 = vpack.c.bf16 %v278, %v278
    %v295 = vpack.c.bf16 %v279, %v279
    %v296 = vunpack.c.l.bf16 %v232
    %v297 = vunpack.c.l.bf16 %v233
    %v298 = vunpack.c.l.bf16 %v234
    %v299 = vunpack.c.l.bf16 %v235
    %v300 = vunpack.c.l.bf16 %v236
    %v301 = vunpack.c.l.bf16 %v237
    %v302 = vunpack.c.l.bf16 %v238
    %v303 = vunpack.c.l.bf16 %v239
    %v304 = vunpack.c.l.bf16 %v240
    %v305 = vunpack.c.l.bf16 %v241
    %v306 = vunpack.c.l.bf16 %v242
    %v307 = vunpack.c.l.bf16 %v243
    %v308 = vunpack.c.l.bf16 %v244
    %v309 = vunpack.c.l.bf16 %v245
    %v310 = vunpack.c.l.bf16 %v246
    %v311 = vunpack.c.l.bf16 %v247
    %v312 = vunpack.c.l.bf16 %v280
    %v313 = vunpack.c.l.bf16 %v281
    %v314 = vunpack.c.l.bf16 %v282
    %v315 = vunpack.c.l.bf16 %v283
    %v316 = vunpack.c.l.bf16 %v284
    %v317 = vunpack.c.l.bf16 %v285
    %v318 = vunpack.c.l.bf16 %v286
    %v319 = vunpack.c.l.bf16 %v287
    %v320 = vunpack.c.l.bf16 %v288
    %v321 = vunpack.c.l.bf16 %v289
    %v322 = vunpack.c.l.bf16 %v290
    %v323 = vunpack.c.l.bf16 %v291
    %v324 = vunpack.c.l.bf16 %v292
    %v325 = vunpack.c.l.bf16 %v293
    %v326 = vunpack.c.l.bf16 %v294
    %v327 = vunpack.c.l.bf16 %v295
    %v328 = vmul.f32 %v296, %v312
    %v329 = vmul.f32 %v297, %v313
    %v330 = vmul.f32 %v298, %v314
    %v331 = vmul.f32 %v299, %v315
    %v332 = vmul.f32 %v300, %v316
    %v333 = vmul.f32 %v301, %v317
    %v334 = vmul.f32 %v302, %v318
    %v335 = vmul.f32 %v303, %v319
    %v336 = vmul.f32 %v304, %v320
    %v337 = vmul.f32 %v305, %v321
    %v338 = vmul.f32 %v306, %v322
    %v339 = vmul.f32 %v307, %v323
    %v340 = vmul.f32 %v308, %v324
    %v341 = vmul.f32 %v309, %v325
    %v342 = vmul.f32 %v310, %v326
    %v343 = vmul.f32 %v311, %v327
    %v344 = vpack.c.bf16 %v328, %v328
    %v345 = vpack.c.bf16 %v329, %v329
    %v346 = vpack.c.bf16 %v330, %v330
    %v347 = vpack.c.bf16 %v331, %v331
    %v348 = vpack.c.bf16 %v332, %v332
    %v349 = vpack.c.bf16 %v333, %v333
    %v350 = vpack.c.bf16 %v334, %v334
    %v351 = vpack.c.bf16 %v335, %v335
    %v352 = vpack.c.bf16 %v336, %v336
    %v353 = vpack.c.bf16 %v337, %v337
    %v354 = vpack.c.bf16 %v338, %v338
    %v355 = vpack.c.bf16 %v339, %v339
    %v356 = vpack.c.bf16 %v340, %v340
    %v357 = vpack.c.bf16 %v341, %v341
    %v358 = vpack.c.bf16 %v342, %v342
    %v359 = vpack.c.bf16 %v343, %v343
    %360 = vst [vmem:[#allocation7] sm:$0xf] %v344
    %361 = vst [vmem:[#allocation7 + $0x4] sm:$0xf] %v345
    %362 = vst [vmem:[#allocation7 + $0x8] sm:$0xf] %v346
    %363 = vst [vmem:[#allocation7 + $0xc] sm:$0xf] %v347
    %364 = vst [vmem:[#allocation7 + $0x10] sm:$0xf] %v348
    %365 = vst [vmem:[#allocation7 + $0x14] sm:$0xf] %v349
    %366 = vst [vmem:[#allocation7 + $0x18] sm:$0xf] %v350
    %367 = vst [vmem:[#allocation7 + $0x1c] sm:$0xf] %v351
    %368 = vst [vmem:[#allocation7 + $0x20] sm:$0xf] %v352
    %369 = vst [vmem:[#allocation7 + $0x24] sm:$0xf] %v353
    %370 = vst [vmem:[#allocation7 + $0x28] sm:$0xf] %v354
    %371 = vst [vmem:[#allocation7 + $0x2c] sm:$0xf] %v355
    %372 = vst [vmem:[#allocation7 + $0x30] sm:$0xf] %v356
    %373 = vst [vmem:[#allocation7 + $0x34] sm:$0xf] %v357
    %374 = vst [vmem:[#allocation7 + $0x38] sm:$0xf] %v358
    %375 = vst [vmem:[#allocation7 + $0x3c] sm:$0xf] %v359
    // Predicated region
    $region10: #{tpu_custom_call.1} parent=1 // pred_check
      _
    $region11: #{tpu_custom_call.1} parent=1 // pred_check_branch
      %377 = sbr.rel (0) target = $region13
    $region12: #{tpu_custom_call.1} parent=1 // pred_region
      %379 = vsyncadd [#allocation6], 0
      %s380 = sshll.u32 [#allocation7], 4
      %s381 = int_to_ptr.vmem [resolvable:$true] %s380
      %s382 = sshll.u32 %s2, 4
      %s383 = int_to_ptr.hbm [resolvable:$true] %s382
      %388 = dma.vmem_to_hbm [thread:$0]  %s381, 1024, %s383, [#allocation6], 64, 64, 4
    $region13: #{tpu_custom_call.1} parent=1 // pred_fallthru
      _
    // Predicated region
    $region14: #{tpu_custom_call.1} parent=1 // pred_check
      _
    $region15: #{tpu_custom_call.1} parent=1 // pred_check_branch
      %390 = sbr.rel (0) target = $region17
    $region16: #{tpu_custom_call.1} parent=1 // pred_region
      %392 = dma.done [#allocation6], 1024
    $region17: #{tpu_custom_call.1} parent=1 // pred_fallthru
      _
    %393 = vsyncpa [#allocation5], 1
    %394 = vsyncpa [#allocation6], 1

</llo_original>
